<compile_context>
chip_gen: v7x
topology: tpu7x:2x2x1
jax: 0.10.0
libtpu: 0.0.40
codegen_flags: <defaults>
</compile_context>

<pallas_src>
import jax
import jax.numpy as jnp
import numpy as np
from jax.experimental import pallas as pl
from jax.experimental.pallas import tpu as pltpu


def _build_conv_matrices(weight, H, W, HWp):
    """Re-express the (1, 2, K, K, K) conv as one block-stacked matmul matrix.

    Returns M of shape (K*2*H*W, HWp) in bf16 such that, with `lhs[d]` being the
    concatenation over kd of the kd-shifted, depth-zero-padded, (H,W)-flattened
    [avg | max] planes,

        out[d, h*W + w] = (lhs[d, :] @ M)[h*W + w]

    equals the PyTorch Conv3d (padding=K//2, bias=False) output.  Zero entries of M
    implement the H/W zero padding; the masked-off rows of `lhs` implement the depth
    zero padding.  Columns [H*W, HWp) are zero padding for lane alignment.
    """
    K = weight.shape[-1]
    P = K // 2
    HW = H * W
    sentinel = 2 * K * K * K  # index of an appended explicit 0.0
    idx = np.full((K, 2 * HW, HWp), sentinel, dtype=np.int32)
    for kd in range(K):
        for c in range(2):
            for kh in range(K):
                for kw in range(K):
                    flat_w = ((c * K + kd) * K + kh) * K + kw
                    for h in range(H):
                        hi = h + kh - P
                        if hi < 0 or hi >= H:
                            continue
                        for w in range(W):
                            wi = w + kw - P
                            if wi < 0 or wi >= W:
                                continue
                            idx[kd, c * HW + hi * W + wi, h * W + w] = flat_w
    w_flat = jnp.concatenate(
        [weight.reshape(-1).astype(jnp.float32), jnp.zeros((1,), jnp.float32)]
    )
    m = w_flat[jnp.asarray(idx)]                      # (K, 2*HW, HWp) f32
    return m.reshape(K * 2 * HW, HWp).astype(jnp.bfloat16)


def _spatial_attention_kernel(x_ref, m_ref, o_ref):
    """Single grid step, whole batch.

    x_ref : VMEM (N, C, D, H*W)       -- input, (H,W) flattened onto lanes
    m_ref : VMEM (K*2*H*W, HWp) bf16  -- conv expressed as one block-stacked matrix
    o_ref : VMEM (N*D, HWp)           -- sigmoid(conv) output (lane-padded)
    """
    N, C, D, HW = x_ref.shape
    K = m_ref.shape[0] // (2 * HW)
    P = K // 2

    # Channel mean / max, lane-dense over H*W.  Max in native dtype, mean in f32.
    x = x_ref[...]                                        # (N, C, D, HW)
    avg = jnp.mean(x.astype(jnp.float32), axis=1)         # (N, D, HW)
    mx = jnp.max(x, axis=1).astype(jnp.float32)           # (N, D, HW)
    planes = jnp.concatenate([avg, mx], axis=-1)          # (N, D, 2*HW), lane width 128

    # Build the fused-matmul LHS: for each batch n and depth-offset kd, the 128-lane
    # column block kd holds planes[n, d + kd - P, :] (zero rows where out of range).
    # Shifts are done on in-register values (pltpu.roll = XLU) + iota mask; every
    # resulting block is (8,128)-aligned, no scratch buffer and no misaligned slices.
    d_idx = jax.lax.broadcasted_iota(jnp.int32, (D, 2 * HW), 0)
    lhs_blocks = []
    for n in range(N):                                    # N, K are compile-time consts
        pn = planes[n]                                    # (D, 2*HW) f32
        parts = []
        for kd in range(K):
            s = kd - P                                    # want shifted[d] = pn[d + s]
            shifted = pn if s == 0 else pltpu.roll(pn, (-s) % D, 0)
            valid = (d_idx + s >= 0) & (d_idx + s < D)
            parts.append(jnp.where(valid, shifted, jnp.zeros_like(shifted)))
        lhs_blocks.append(jnp.concatenate(parts, axis=-1))  # (D, K*2*HW)
    lhs = jnp.concatenate(lhs_blocks, axis=0).astype(jnp.bfloat16)  # (N*D, K*2*HW)

    # One 896-deep bf16 MXU contraction, f32 accumulation, then sigmoid (EUP).
    acc = jnp.dot(lhs, m_ref[...], preferred_element_type=jnp.float32)  # (N*D, HWp)
    o_ref[...] = jax.nn.sigmoid(acc).astype(o_ref.dtype)


def spatial_attention(x, weight):
    """x: (N, C, D, H, W); weight: (1, 2, K, K, K) PyTorch OIDHW. Returns (N, 1, D, H, W)."""
    N, C, D, H, W = x.shape
    K = weight.shape[-1]
    HW = H * W
    # Lane-dense output width.  128 exactly fills v5e's MXU; if HW ever spans multiple
    # MXU passes, round to 256 so v6e/v7x's 256-wide MXU is filled per pass.
    lane_mult = 128 if HW <= 128 else 256
    HWp = ((HW + lane_mult - 1) // lane_mult) * lane_mult

    m = _build_conv_matrices(weight, H, W, HWp)           # (K*2*HW, HWp) bf16
    x2 = x.reshape(N, C, D, HW)                           # lane-dense input layout

    out = pl.pallas_call(
        _spatial_attention_kernel,
        out_shape=jax.ShapeDtypeStruct((N * D, HWp), x.dtype),
        grid_spec=pltpu.PrefetchScalarGridSpec(
            num_scalar_prefetch=0,
            grid=(1,),   # batch folded into matmul rows: one step, no per-N overhead
            in_specs=[
                pl.BlockSpec((N, C, D, HW), lambda i: (0, 0, 0, 0)),
                pl.BlockSpec((K * 2 * HW, HWp), lambda i: (0, 0)),
            ],
            out_specs=pl.BlockSpec((N * D, HWp), lambda i: (0, 0)),
        ),
        compiler_params=pltpu.CompilerParams(
            dimension_semantics=("arbitrary",),
            vmem_limit_bytes=32 * 1024 * 1024,
        ),
    )(x2, m)

    return out[:, :HW].reshape(N, 1, D, H, W)


def spatial_attention_reference(x, weight):
    """Pure-JAX reference matching the PyTorch forward."""
    avg = jnp.mean(x, axis=1, keepdims=True)
    mx = jnp.max(x, axis=1, keepdims=True)
    xc = jnp.concatenate([avg, mx], axis=1)
    P = weight.shape[-1] // 2
    y = jax.lax.conv_general_dilated(
        xc, weight,
        window_strides=(1, 1, 1),
        padding=[(P, P)] * 3,
        dimension_numbers=("NCDHW", "OIDHW", "NCDHW"),
        precision=jax.lax.Precision.HIGHEST,
    )
    return jax.nn.sigmoid(y)


if __name__ == "__main__":
    key = jax.random.PRNGKey(0)
    kx, kw = jax.random.split(key)

    # Small shapes consistent with the module: batch=2, channels=4, volume 8^3.
    N, C, D, H, W = 2, 4, 8, 8, 8
    K = 7  # kernel_size=7 (module default), padding = 3, no bias

    x = jax.random.normal(kx, (N, C, D, H, W), dtype=jnp.float32)
    weight = 0.05 * jax.random.normal(kw, (1, 2, K, K, K), dtype=jnp.float32)

    out = spatial_attention(x, weight)
    out = jax.block_until_ready(out)

    ref = spatial_attention_reference(x, weight)
    assert out.shape == (N, 1, D, H, W)
    # Tolerance covers the bf16 MXU operand path (686-term conv, f32 accumulation,
    # sigmoid output in [0,1]); any layout/indexing bug would show as an O(0.1) error.
    np.testing.assert_allclose(np.asarray(out), np.asarray(ref), atol=1e-2, rtol=1e-2)

    print("KERNEL_OK")
</pallas_src>

<mosaic_0001>
module attributes {stable_mosaic.version = 11 : i64} {
  func.func @_spatial_attention_kernel(%arg0: i32, %arg1: memref<2x4x8x64xf32, #tpu.memory_space<vmem>>, %arg2: memref<896x128xbf16, #tpu.memory_space<vmem>>, %arg3: memref<16x128xf32, #tpu.memory_space<vmem>>) attributes {dimension_semantics = [#tpu.dimension_semantics<arbitrary>], iteration_bounds = array<i64: 1>, scalar_prefetch = 0 : i64, scratch_operands = 0 : i64, tpu.core_type = #tpu.core_type<tc>, window_params = [{pipeline_mode = #tpu.pipeline_mode<synchronous>, transform_indices = @transform_0, window_bounds = array<i64: 2, 4, 8, 64>}, {pipeline_mode = #tpu.pipeline_mode<synchronous>, transform_indices = @transform_1, window_bounds = array<i64: 896, 128>}, {pipeline_mode = #tpu.pipeline_mode<synchronous>, transform_indices = @transform_2, window_bounds = array<i64: 16, 128>}]} {
    %c0 = arith.constant 0 : index
    %c0_0 = arith.constant 0 : index
    %c0_1 = arith.constant 0 : index
    %c0_2 = arith.constant 0 : index
    %0 = vector.load %arg1[%c0, %c0_0, %c0_1, %c0_2] : memref<2x4x8x64xf32, #tpu.memory_space<vmem>>, vector<2x4x8x64xf32>
    %cst = arith.constant dense<0.000000e+00> : vector<2x8x64xf32>
    %1 = vector.multi_reduction <add>, %0, %cst [1] : vector<2x4x8x64xf32> to vector<2x8x64xf32>
    %cst_3 = arith.constant 4.000000e+00 : f32
    %2 = vector.broadcast %cst_3 : f32 to vector<2x8x64xf32>
    %3 = arith.divf %1, %2 : vector<2x8x64xf32>
    %cst_4 = arith.constant dense<0xFF800000> : vector<2x8x64xf32>
    %4 = vector.multi_reduction <maximumf>, %0, %cst_4 [1] : vector<2x4x8x64xf32> to vector<2x8x64xf32>
    %5 = tpu.concatenate %3, %4 in 2 : vector<2x8x64xf32>, vector<2x8x64xf32> -> vector<2x8x128xf32>
    %6 = tpu.iota {dimensions = array<i32: 0>} : vector<8x128xi32>
    %7 = vector.extract_strided_slice %5 {offsets = [0, 0, 0], sizes = [1, 8, 128], strides = [1, 1, 1]} : vector<2x8x128xf32> to vector<1x8x128xf32>
    %8 = vector.shape_cast %7 : vector<1x8x128xf32> to vector<8x128xf32>
    %c3_i32 = arith.constant 3 : i32
    %9 = tpu.dynamic_rotate %8 by %c3_i32 dim 0 : vector<8x128xf32>, i32 -> vector<8x128xf32>
    %c-3_i32 = arith.constant -3 : i32
    %10 = vector.broadcast %c-3_i32 : i32 to vector<8x128xi32>
    %11 = arith.addi %6, %10 : vector<8x128xi32>
    %c0_i32 = arith.constant 0 : i32
    %12 = vector.broadcast %c0_i32 : i32 to vector<8x128xi32>
    %13 = arith.cmpi sge, %11, %12 : vector<8x128xi32>
    %c-3_i32_5 = arith.constant -3 : i32
    %14 = vector.broadcast %c-3_i32_5 : i32 to vector<8x128xi32>
    %15 = arith.addi %6, %14 : vector<8x128xi32>
    %c8_i32 = arith.constant 8 : i32
    %16 = vector.broadcast %c8_i32 : i32 to vector<8x128xi32>
    %17 = arith.cmpi slt, %15, %16 : vector<8x128xi32>
    %18 = arith.andi %13, %17 : vector<8x128xi1>
    %cst_6 = arith.constant 0.000000e+00 : f32
    %19 = vector.broadcast %cst_6 : f32 to vector<8x128xf32>
    %20 = arith.select %18, %9, %19 : vector<8x128xi1>, vector<8x128xf32>
    %c2_i32 = arith.constant 2 : i32
    %21 = tpu.dynamic_rotate %8 by %c2_i32 dim 0 : vector<8x128xf32>, i32 -> vector<8x128xf32>
    %c-2_i32 = arith.constant -2 : i32
    %22 = vector.broadcast %c-2_i32 : i32 to vector<8x128xi32>
    %23 = arith.addi %6, %22 : vector<8x128xi32>
    %c0_i32_7 = arith.constant 0 : i32
    %24 = vector.broadcast %c0_i32_7 : i32 to vector<8x128xi32>
    %25 = arith.cmpi sge, %23, %24 : vector<8x128xi32>
    %c-2_i32_8 = arith.constant -2 : i32
    %26 = vector.broadcast %c-2_i32_8 : i32 to vector<8x128xi32>
    %27 = arith.addi %6, %26 : vector<8x128xi32>
    %c8_i32_9 = arith.constant 8 : i32
    %28 = vector.broadcast %c8_i32_9 : i32 to vector<8x128xi32>
    %29 = arith.cmpi slt, %27, %28 : vector<8x128xi32>
    %30 = arith.andi %25, %29 : vector<8x128xi1>
    %cst_10 = arith.constant 0.000000e+00 : f32
    %31 = vector.broadcast %cst_10 : f32 to vector<8x128xf32>
    %32 = arith.select %30, %21, %31 : vector<8x128xi1>, vector<8x128xf32>
    %c1_i32 = arith.constant 1 : i32
    %33 = tpu.dynamic_rotate %8 by %c1_i32 dim 0 : vector<8x128xf32>, i32 -> vector<8x128xf32>
    %c-1_i32 = arith.constant -1 : i32
    %34 = vector.broadcast %c-1_i32 : i32 to vector<8x128xi32>
    %35 = arith.addi %6, %34 : vector<8x128xi32>
    %c0_i32_11 = arith.constant 0 : i32
    %36 = vector.broadcast %c0_i32_11 : i32 to vector<8x128xi32>
    %37 = arith.cmpi sge, %35, %36 : vector<8x128xi32>
    %c-1_i32_12 = arith.constant -1 : i32
    %38 = vector.broadcast %c-1_i32_12 : i32 to vector<8x128xi32>
    %39 = arith.addi %6, %38 : vector<8x128xi32>
    %c8_i32_13 = arith.constant 8 : i32
    %40 = vector.broadcast %c8_i32_13 : i32 to vector<8x128xi32>
    %41 = arith.cmpi slt, %39, %40 : vector<8x128xi32>
    %42 = arith.andi %37, %41 : vector<8x128xi1>
    %cst_14 = arith.constant 0.000000e+00 : f32
    %43 = vector.broadcast %cst_14 : f32 to vector<8x128xf32>
    %44 = arith.select %42, %33, %43 : vector<8x128xi1>, vector<8x128xf32>
    %c0_i32_15 = arith.constant 0 : i32
    %45 = vector.broadcast %c0_i32_15 : i32 to vector<8x128xi32>
    %46 = arith.addi %6, %45 : vector<8x128xi32>
    %c0_i32_16 = arith.constant 0 : i32
    %47 = vector.broadcast %c0_i32_16 : i32 to vector<8x128xi32>
    %48 = arith.cmpi sge, %46, %47 : vector<8x128xi32>
    %c0_i32_17 = arith.constant 0 : i32
    %49 = vector.broadcast %c0_i32_17 : i32 to vector<8x128xi32>
    %50 = arith.addi %6, %49 : vector<8x128xi32>
    %c8_i32_18 = arith.constant 8 : i32
    %51 = vector.broadcast %c8_i32_18 : i32 to vector<8x128xi32>
    %52 = arith.cmpi slt, %50, %51 : vector<8x128xi32>
    %53 = arith.andi %48, %52 : vector<8x128xi1>
    %cst_19 = arith.constant 0.000000e+00 : f32
    %54 = vector.broadcast %cst_19 : f32 to vector<8x128xf32>
    %55 = arith.select %53, %8, %54 : vector<8x128xi1>, vector<8x128xf32>
    %c7_i32 = arith.constant 7 : i32
    %56 = tpu.dynamic_rotate %8 by %c7_i32 dim 0 : vector<8x128xf32>, i32 -> vector<8x128xf32>
    %c1_i32_20 = arith.constant 1 : i32
    %57 = vector.broadcast %c1_i32_20 : i32 to vector<8x128xi32>
    %58 = arith.addi %6, %57 : vector<8x128xi32>
    %c0_i32_21 = arith.constant 0 : i32
    %59 = vector.broadcast %c0_i32_21 : i32 to vector<8x128xi32>
    %60 = arith.cmpi sge, %58, %59 : vector<8x128xi32>
    %c1_i32_22 = arith.constant 1 : i32
    %61 = vector.broadcast %c1_i32_22 : i32 to vector<8x128xi32>
    %62 = arith.addi %6, %61 : vector<8x128xi32>
    %c8_i32_23 = arith.constant 8 : i32
    %63 = vector.broadcast %c8_i32_23 : i32 to vector<8x128xi32>
    %64 = arith.cmpi slt, %62, %63 : vector<8x128xi32>
    %65 = arith.andi %60, %64 : vector<8x128xi1>
    %cst_24 = arith.constant 0.000000e+00 : f32
    %66 = vector.broadcast %cst_24 : f32 to vector<8x128xf32>
    %67 = arith.select %65, %56, %66 : vector<8x128xi1>, vector<8x128xf32>
    %c6_i32 = arith.constant 6 : i32
    %68 = tpu.dynamic_rotate %8 by %c6_i32 dim 0 : vector<8x128xf32>, i32 -> vector<8x128xf32>
    %c2_i32_25 = arith.constant 2 : i32
    %69 = vector.broadcast %c2_i32_25 : i32 to vector<8x128xi32>
    %70 = arith.addi %6, %69 : vector<8x128xi32>
    %c0_i32_26 = arith.constant 0 : i32
    %71 = vector.broadcast %c0_i32_26 : i32 to vector<8x128xi32>
    %72 = arith.cmpi sge, %70, %71 : vector<8x128xi32>
    %c2_i32_27 = arith.constant 2 : i32
    %73 = vector.broadcast %c2_i32_27 : i32 to vector<8x128xi32>
    %74 = arith.addi %6, %73 : vector<8x128xi32>
    %c8_i32_28 = arith.constant 8 : i32
    %75 = vector.broadcast %c8_i32_28 : i32 to vector<8x128xi32>
    %76 = arith.cmpi slt, %74, %75 : vector<8x128xi32>
    %77 = arith.andi %72, %76 : vector<8x128xi1>
    %cst_29 = arith.constant 0.000000e+00 : f32
    %78 = vector.broadcast %cst_29 : f32 to vector<8x128xf32>
    %79 = arith.select %77, %68, %78 : vector<8x128xi1>, vector<8x128xf32>
    %c5_i32 = arith.constant 5 : i32
    %80 = tpu.dynamic_rotate %8 by %c5_i32 dim 0 : vector<8x128xf32>, i32 -> vector<8x128xf32>
    %c3_i32_30 = arith.constant 3 : i32
    %81 = vector.broadcast %c3_i32_30 : i32 to vector<8x128xi32>
    %82 = arith.addi %6, %81 : vector<8x128xi32>
    %c0_i32_31 = arith.constant 0 : i32
    %83 = vector.broadcast %c0_i32_31 : i32 to vector<8x128xi32>
    %84 = arith.cmpi sge, %82, %83 : vector<8x128xi32>
    %c3_i32_32 = arith.constant 3 : i32
    %85 = vector.broadcast %c3_i32_32 : i32 to vector<8x128xi32>
    %86 = arith.addi %6, %85 : vector<8x128xi32>
    %c8_i32_33 = arith.constant 8 : i32
    %87 = vector.broadcast %c8_i32_33 : i32 to vector<8x128xi32>
    %88 = arith.cmpi slt, %86, %87 : vector<8x128xi32>
    %89 = arith.andi %84, %88 : vector<8x128xi1>
    %cst_34 = arith.constant 0.000000e+00 : f32
    %90 = vector.broadcast %cst_34 : f32 to vector<8x128xf32>
    %91 = arith.select %89, %80, %90 : vector<8x128xi1>, vector<8x128xf32>
    %92 = tpu.concatenate %20, %32, %44, %55, %67, %79, %91 in 1 : vector<8x128xf32>, vector<8x128xf32>, vector<8x128xf32>, vector<8x128xf32>, vector<8x128xf32>, vector<8x128xf32>, vector<8x128xf32> -> vector<8x896xf32>
    %93 = vector.extract_strided_slice %5 {offsets = [1, 0, 0], sizes = [1, 8, 128], strides = [1, 1, 1]} : vector<2x8x128xf32> to vector<1x8x128xf32>
    %94 = vector.shape_cast %93 : vector<1x8x128xf32> to vector<8x128xf32>
    %c3_i32_35 = arith.constant 3 : i32
    %95 = tpu.dynamic_rotate %94 by %c3_i32_35 dim 0 : vector<8x128xf32>, i32 -> vector<8x128xf32>
    %c-3_i32_36 = arith.constant -3 : i32
    %96 = vector.broadcast %c-3_i32_36 : i32 to vector<8x128xi32>
    %97 = arith.addi %6, %96 : vector<8x128xi32>
    %c0_i32_37 = arith.constant 0 : i32
    %98 = vector.broadcast %c0_i32_37 : i32 to vector<8x128xi32>
    %99 = arith.cmpi sge, %97, %98 : vector<8x128xi32>
    %c-3_i32_38 = arith.constant -3 : i32
    %100 = vector.broadcast %c-3_i32_38 : i32 to vector<8x128xi32>
    %101 = arith.addi %6, %100 : vector<8x128xi32>
    %c8_i32_39 = arith.constant 8 : i32
    %102 = vector.broadcast %c8_i32_39 : i32 to vector<8x128xi32>
    %103 = arith.cmpi slt, %101, %102 : vector<8x128xi32>
    %104 = arith.andi %99, %103 : vector<8x128xi1>
    %cst_40 = arith.constant 0.000000e+00 : f32
    %105 = vector.broadcast %cst_40 : f32 to vector<8x128xf32>
    %106 = arith.select %104, %95, %105 : vector<8x128xi1>, vector<8x128xf32>
    %c2_i32_41 = arith.constant 2 : i32
    %107 = tpu.dynamic_rotate %94 by %c2_i32_41 dim 0 : vector<8x128xf32>, i32 -> vector<8x128xf32>
    %c-2_i32_42 = arith.constant -2 : i32
    %108 = vector.broadcast %c-2_i32_42 : i32 to vector<8x128xi32>
    %109 = arith.addi %6, %108 : vector<8x128xi32>
    %c0_i32_43 = arith.constant 0 : i32
    %110 = vector.broadcast %c0_i32_43 : i32 to vector<8x128xi32>
    %111 = arith.cmpi sge, %109, %110 : vector<8x128xi32>
    %c-2_i32_44 = arith.constant -2 : i32
    %112 = vector.broadcast %c-2_i32_44 : i32 to vector<8x128xi32>
    %113 = arith.addi %6, %112 : vector<8x128xi32>
    %c8_i32_45 = arith.constant 8 : i32
    %114 = vector.broadcast %c8_i32_45 : i32 to vector<8x128xi32>
    %115 = arith.cmpi slt, %113, %114 : vector<8x128xi32>
    %116 = arith.andi %111, %115 : vector<8x128xi1>
    %cst_46 = arith.constant 0.000000e+00 : f32
    %117 = vector.broadcast %cst_46 : f32 to vector<8x128xf32>
    %118 = arith.select %116, %107, %117 : vector<8x128xi1>, vector<8x128xf32>
    %c1_i32_47 = arith.constant 1 : i32
    %119 = tpu.dynamic_rotate %94 by %c1_i32_47 dim 0 : vector<8x128xf32>, i32 -> vector<8x128xf32>
    %c-1_i32_48 = arith.constant -1 : i32
    %120 = vector.broadcast %c-1_i32_48 : i32 to vector<8x128xi32>
    %121 = arith.addi %6, %120 : vector<8x128xi32>
    %c0_i32_49 = arith.constant 0 : i32
    %122 = vector.broadcast %c0_i32_49 : i32 to vector<8x128xi32>
    %123 = arith.cmpi sge, %121, %122 : vector<8x128xi32>
    %c-1_i32_50 = arith.constant -1 : i32
    %124 = vector.broadcast %c-1_i32_50 : i32 to vector<8x128xi32>
    %125 = arith.addi %6, %124 : vector<8x128xi32>
    %c8_i32_51 = arith.constant 8 : i32
    %126 = vector.broadcast %c8_i32_51 : i32 to vector<8x128xi32>
    %127 = arith.cmpi slt, %125, %126 : vector<8x128xi32>
    %128 = arith.andi %123, %127 : vector<8x128xi1>
    %cst_52 = arith.constant 0.000000e+00 : f32
    %129 = vector.broadcast %cst_52 : f32 to vector<8x128xf32>
    %130 = arith.select %128, %119, %129 : vector<8x128xi1>, vector<8x128xf32>
    %c0_i32_53 = arith.constant 0 : i32
    %131 = vector.broadcast %c0_i32_53 : i32 to vector<8x128xi32>
    %132 = arith.addi %6, %131 : vector<8x128xi32>
    %c0_i32_54 = arith.constant 0 : i32
    %133 = vector.broadcast %c0_i32_54 : i32 to vector<8x128xi32>
    %134 = arith.cmpi sge, %132, %133 : vector<8x128xi32>
    %c0_i32_55 = arith.constant 0 : i32
    %135 = vector.broadcast %c0_i32_55 : i32 to vector<8x128xi32>
    %136 = arith.addi %6, %135 : vector<8x128xi32>
    %c8_i32_56 = arith.constant 8 : i32
    %137 = vector.broadcast %c8_i32_56 : i32 to vector<8x128xi32>
    %138 = arith.cmpi slt, %136, %137 : vector<8x128xi32>
    %139 = arith.andi %134, %138 : vector<8x128xi1>
    %cst_57 = arith.constant 0.000000e+00 : f32
    %140 = vector.broadcast %cst_57 : f32 to vector<8x128xf32>
    %141 = arith.select %139, %94, %140 : vector<8x128xi1>, vector<8x128xf32>
    %c7_i32_58 = arith.constant 7 : i32
    %142 = tpu.dynamic_rotate %94 by %c7_i32_58 dim 0 : vector<8x128xf32>, i32 -> vector<8x128xf32>
    %c1_i32_59 = arith.constant 1 : i32
    %143 = vector.broadcast %c1_i32_59 : i32 to vector<8x128xi32>
    %144 = arith.addi %6, %143 : vector<8x128xi32>
    %c0_i32_60 = arith.constant 0 : i32
    %145 = vector.broadcast %c0_i32_60 : i32 to vector<8x128xi32>
    %146 = arith.cmpi sge, %144, %145 : vector<8x128xi32>
    %c1_i32_61 = arith.constant 1 : i32
    %147 = vector.broadcast %c1_i32_61 : i32 to vector<8x128xi32>
    %148 = arith.addi %6, %147 : vector<8x128xi32>
    %c8_i32_62 = arith.constant 8 : i32
    %149 = vector.broadcast %c8_i32_62 : i32 to vector<8x128xi32>
    %150 = arith.cmpi slt, %148, %149 : vector<8x128xi32>
    %151 = arith.andi %146, %150 : vector<8x128xi1>
    %cst_63 = arith.constant 0.000000e+00 : f32
    %152 = vector.broadcast %cst_63 : f32 to vector<8x128xf32>
    %153 = arith.select %151, %142, %152 : vector<8x128xi1>, vector<8x128xf32>
    %c6_i32_64 = arith.constant 6 : i32
    %154 = tpu.dynamic_rotate %94 by %c6_i32_64 dim 0 : vector<8x128xf32>, i32 -> vector<8x128xf32>
    %c2_i32_65 = arith.constant 2 : i32
    %155 = vector.broadcast %c2_i32_65 : i32 to vector<8x128xi32>
    %156 = arith.addi %6, %155 : vector<8x128xi32>
    %c0_i32_66 = arith.constant 0 : i32
    %157 = vector.broadcast %c0_i32_66 : i32 to vector<8x128xi32>
    %158 = arith.cmpi sge, %156, %157 : vector<8x128xi32>
    %c2_i32_67 = arith.constant 2 : i32
    %159 = vector.broadcast %c2_i32_67 : i32 to vector<8x128xi32>
    %160 = arith.addi %6, %159 : vector<8x128xi32>
    %c8_i32_68 = arith.constant 8 : i32
    %161 = vector.broadcast %c8_i32_68 : i32 to vector<8x128xi32>
    %162 = arith.cmpi slt, %160, %161 : vector<8x128xi32>
    %163 = arith.andi %158, %162 : vector<8x128xi1>
    %cst_69 = arith.constant 0.000000e+00 : f32
    %164 = vector.broadcast %cst_69 : f32 to vector<8x128xf32>
    %165 = arith.select %163, %154, %164 : vector<8x128xi1>, vector<8x128xf32>
    %c5_i32_70 = arith.constant 5 : i32
    %166 = tpu.dynamic_rotate %94 by %c5_i32_70 dim 0 : vector<8x128xf32>, i32 -> vector<8x128xf32>
    %c3_i32_71 = arith.constant 3 : i32
    %167 = vector.broadcast %c3_i32_71 : i32 to vector<8x128xi32>
    %168 = arith.addi %6, %167 : vector<8x128xi32>
    %c0_i32_72 = arith.constant 0 : i32
    %169 = vector.broadcast %c0_i32_72 : i32 to vector<8x128xi32>
    %170 = arith.cmpi sge, %168, %169 : vector<8x128xi32>
    %c3_i32_73 = arith.constant 3 : i32
    %171 = vector.broadcast %c3_i32_73 : i32 to vector<8x128xi32>
    %172 = arith.addi %6, %171 : vector<8x128xi32>
    %c8_i32_74 = arith.constant 8 : i32
    %173 = vector.broadcast %c8_i32_74 : i32 to vector<8x128xi32>
    %174 = arith.cmpi slt, %172, %173 : vector<8x128xi32>
    %175 = arith.andi %170, %174 : vector<8x128xi1>
    %cst_75 = arith.constant 0.000000e+00 : f32
    %176 = vector.broadcast %cst_75 : f32 to vector<8x128xf32>
    %177 = arith.select %175, %166, %176 : vector<8x128xi1>, vector<8x128xf32>
    %178 = tpu.concatenate %106, %118, %130, %141, %153, %165, %177 in 1 : vector<8x128xf32>, vector<8x128xf32>, vector<8x128xf32>, vector<8x128xf32>, vector<8x128xf32>, vector<8x128xf32>, vector<8x128xf32> -> vector<8x896xf32>
    %179 = tpu.concatenate %92, %178 in 0 : vector<8x896xf32>, vector<8x896xf32> -> vector<16x896xf32>
    %180 = arith.truncf %179 : vector<16x896xf32> to vector<16x896xbf16>
    %c0_76 = arith.constant 0 : index
    %c0_77 = arith.constant 0 : index
    %181 = vector.load %arg2[%c0_76, %c0_77] : memref<896x128xbf16, #tpu.memory_space<vmem>>, vector<896x128xbf16>
    %cst_78 = arith.constant dense<0.000000e+00> : vector<16x128xf32>
    %182 = tpu.matmul %180, %181, %cst_78 {dimension_numbers = #tpu.dot_dimension_numbers<[1], [0], [0], [1], [0, 0, 1, 1], [], []>} : vector<16x896xbf16>, vector<896x128xbf16>, vector<16x128xf32> -> vector<16x128xf32>
    %183 = arith.negf %182 : vector<16x128xf32>
    %184 = math.exp %183 : vector<16x128xf32>
    %cst_79 = arith.constant 1.000000e+00 : f32
    %185 = vector.broadcast %cst_79 : f32 to vector<16x128xf32>
    %186 = arith.addf %185, %184 : vector<16x128xf32>
    %187 = arith.divf %185, %186 : vector<16x128xf32>
    %c0_80 = arith.constant 0 : index
    %c0_81 = arith.constant 0 : index
    %188 = vector.load %arg3[%c0_80, %c0_81] : memref<16x128xf32, #tpu.memory_space<vmem>>, vector<16x128xf32>
    tpu.vector_store %arg3[%c0_80, %c0_81], %187 {strides = array<i32>} : memref<16x128xf32, #tpu.memory_space<vmem>>, vector<16x128xf32>,
    return
  }
  func.func @transform_0(%arg0: i32) -> (i32, i32, i32, i32) {
    %c0_i32 = arith.constant 0 : i32
    %c0_i32_0 = arith.constant 0 : i32
    %c0_i32_1 = arith.constant 0 : i32
    %c0_i32_2 = arith.constant 0 : i32
    %c0_i32_3 = arith.constant 0 : i32
    return %c0_i32, %c0_i32_0, %c0_i32_1, %c0_i32_2 : i32, i32, i32, i32
  }
  func.func @transform_1(%arg0: i32) -> (i32, i32) {
    %c0_i32 = arith.constant 0 : i32
    %c0_i32_0 = arith.constant 0 : i32
    %c0_i32_1 = arith.constant 0 : i32
    return %c0_i32, %c0_i32_0 : i32, i32
  }
  func.func @transform_2(%arg0: i32) -> (i32, i32) {
    %c0_i32 = arith.constant 0 : i32
    %c0_i32_0 = arith.constant 0 : i32
    %c0_i32_1 = arith.constant 0 : i32
    return %c0_i32, %c0_i32_0 : i32, i32
  }
}

</mosaic_0001>

<llo_original>
// kernel: tpu_custom_call.1
$region0: #{tpu_custom_call.1}
  #allocation0 [shape = 'u32[]', space=smem, size = 0x4, offset = 0x4, fixed_abs, tag = 'smem constant byte address 0x4 - core index']
  #allocation1 [shape = 'u32[144,128]{1,0:T(1,128)}', space=vmem, size = 0x12000, scoped, tag = 'internal scratch']
  %s0 = inlined_call_operand.hbm [shape: f32[2,4,8,64], index: 0, kind: input, shape index: {}]
  %s1 = inlined_call_operand.hbm [shape: bf16[896,128], index: 1, kind: input, shape index: {}]
  %s2 = inlined_call_operand.hbm [shape: f32[16,128], index: 2, kind: output, shape index: {}]
  %s3 = sld [smem:[#allocation0]]
  $region26: #{tpu_custom_call.1} parent=0
    _
  %s5 = ssub.s32 1, %s3
  %s6 = scalar_select 0, %s5, %s3
  $region1: #{tpu_custom_call.1} parent=0
    #allocation2 [shape = 'u8[32768]{0}', space=vmem, size = 0x8000, scoped, tag = 'input window, operand 0, single buffered']
    #allocation3 [shape = 's32[1]{0}', space=sflag, size = 0x4, scoped, tag = 'scoped memory for tpu_custom_call.1']
    #allocation4 [shape = 's32[1]{0}', space=sflag, size = 0x4, scoped, tag = 'scoped memory for tpu_custom_call.1']
    #allocation5 [shape = 'u8[229376]{0}', space=vmem, size = 0x38000, scoped, tag = 'input window, operand 1, single buffered']
    #allocation6 [shape = 's32[1]{0}', space=sflag, size = 0x4, scoped, tag = 'scoped memory for tpu_custom_call.1']
    #allocation7 [shape = 'u8[8192]{0}', space=vmem, size = 0x2000, scoped, tag = 'output window, operand 0, single buffered']
    %7 = vsyncpa [#allocation3], 0
    %8 = vsyncpa [#allocation6], 0
    %9 = vsyncpa [#allocation4], 0
    // Predicated region
    $region2: #{tpu_custom_call.1} parent=1 // pred_check
      _
    $region3: #{tpu_custom_call.1} parent=1 // pred_check_branch
      %11 = sbr.rel (0) target = $region5
    $region4: #{tpu_custom_call.1} parent=1 // pred_region
      %s13 = ssub.s32 1024, 1024
      %14 = vsyncadd [#allocation3], %s13
      %s15 = sshll.u32 [#allocation2], 4
      %s16 = int_to_ptr.vmem [resolvable:$true] %s15
      %21 = dma.hbm_to_vmem [thread:$0]  %s0, 1024, %s16, [#allocation3], 128, 128, 8
    $region5: #{tpu_custom_call.1} parent=1 // pred_fallthru
      _
    // Predicated region
    $region6: #{tpu_custom_call.1} parent=1 // pred_check
      _
    $region7: #{tpu_custom_call.1} parent=1 // pred_check_branch
      %23 = sbr.rel (0) target = $region9
    $region8: #{tpu_custom_call.1} parent=1 // pred_region
      %s25 = ssub.s32 7168, 7168
      %26 = vsyncadd [#allocation6], %s25
      %s27 = sshll.u32 [#allocation5], 4
      %s28 = int_to_ptr.vmem [resolvable:$true] %s27
      %33 = dma.hbm_to_vmem [thread:$0]  %s1, 7168, %s28, [#allocation6], 64, 64, 4
    $region9: #{tpu_custom_call.1} parent=1 // pred_fallthru
      _
    // Predicated region
    $region10: #{tpu_custom_call.1} parent=1 // pred_check
      _
    $region11: #{tpu_custom_call.1} parent=1 // pred_check_branch
      %35 = sbr.rel (0) target = $region13
    $region12: #{tpu_custom_call.1} parent=1 // pred_region
      %36 = dma.done [#allocation3], 1024
    $region13: #{tpu_custom_call.1} parent=1 // pred_fallthru
      _
    // Predicated region
    $region14: #{tpu_custom_call.1} parent=1 // pred_check
      _
    $region15: #{tpu_custom_call.1} parent=1 // pred_check_branch
      %38 = sbr.rel (0) target = $region17
    $region16: #{tpu_custom_call.1} parent=1 // pred_region
      %39 = dma.done [#allocation6], 7168
    $region17: #{tpu_custom_call.1} parent=1 // pred_fallthru
      _
    %v41 = vld [vmem:[#allocation2] sm:$0xff]
    %v42 = vld [vmem:[#allocation2 + $0x8] sm:$0xff]
    %v43 = vld [vmem:[#allocation2 + $0x10] sm:$0xff]
    %v44 = vld [vmem:[#allocation2 + $0x18] sm:$0xff]
    %v45 = vld [vmem:[#allocation2 + $0x20] sm:$0xff]
    %v46 = vld [vmem:[#allocation2 + $0x28] sm:$0xff]
    %v47 = vld [vmem:[#allocation2 + $0x30] sm:$0xff]
    %v48 = vld [vmem:[#allocation2 + $0x38] sm:$0xff]
    %vm49 = vcmask 523264
    %v50 = vsel %vm49, %v41, 0.0
    %v51 = vsel %vm49, %v42, 0.0
    %v52 = vadd.f32 %v50, %v51
    %v53 = vsel %vm49, %v43, 0.0
    %v54 = vadd.f32 %v52, %v53
    %v55 = vsel %vm49, %v44, 0.0
    %v56 = vadd.f32 %v54, %v55
    %v57 = vsel %vm49, %v45, 0.0
    %v58 = vsel %vm49, %v46, 0.0
    %v59 = vadd.f32 %v57, %v58
    %v60 = vsel %vm49, %v47, 0.0
    %v61 = vadd.f32 %v59, %v60
    %v62 = vsel %vm49, %v48, 0.0
    %v63 = vadd.f32 %v61, %v62
    %v64 = vrcp.pop 4.0
    %v65 = vmul.f32 %v56, %v64
    %v66 = vmul.f32 %v63, %v64
    %v67 = vsel %vm49, %v41, -inf
    %v68 = vsel %vm49, %v42, -inf
    %v69 = vsel %vm49, %v43, -inf
    %v70 = vmax.f32 %v67, %v69
    %v71 = vsel %vm49, %v44, -inf
    %v72 = vmax.f32 %v68, %v71
    %v73 = vmax.f32 %v70, %v72
    %v74 = vsel %vm49, %v45, -inf
    %v75 = vsel %vm49, %v46, -inf
    %v76 = vsel %vm49, %v47, -inf
    %v77 = vmax.f32 %v74, %v76
    %v78 = vsel %vm49, %v48, -inf
    %v79 = vmax.f32 %v75, %v78
    %v80 = vmax.f32 %v77, %v79
    %83 = vrot.lane.b32.xlu0 %v73, 64
    %v84 = vpop.permute.xlu0 %83
    %85 = vrot.lane.b32.xlu0 %v80, 64
    %v86 = vpop.permute.xlu0 %85
    %v89 = vsel %vm49, %v65, %v84
    %v90 = vsel %vm49, %v66, %v86
    %v91 = vlaneseq
    %v92 = vshrl.u32 %v91, 7
    %v93 = vrot.slane %v89, 5
    %v94 = vadd.s32 %v92, 4294967293
    %vm95 = vcmp.ge.s32.totalorder %v94, 0
    %vm96 = vcmp.lt.s32.totalorder %v94, 8
    %vm97 = vmand %vm95, %vm96
    %v98 = vsel %vm97, %v93, 0.0
    %v99 = vrot.slane %v89, 6
    %v100 = vadd.s32 %v92, 4294967294
    %vm101 = vcmp.ge.s32.totalorder %v100, 0
    %vm102 = vcmp.lt.s32.totalorder %v100, 8
    %vm103 = vmand %vm101, %vm102
    %v104 = vsel %vm103, %v99, 0.0
    %v105 = vrot.slane %v89, 7
    %v106 = vadd.s32 %v92, 4294967295
    %vm107 = vcmp.ge.s32.totalorder %v106, 0
    %vm108 = vcmp.lt.s32.totalorder %v106, 8
    %vm109 = vmand %vm107, %vm108
    %v110 = vsel %vm109, %v105, 0.0
    %vm111 = vcmp.ge.s32.totalorder %v92, 0
    %vm112 = vcmp.lt.s32.totalorder %v92, 8
    %vm113 = vmand %vm111, %vm112
    %v114 = vsel %vm113, %v89, 0.0
    %v115 = vrot.slane %v89, 1
    %v116 = vadd.s32 %v92, 1
    %vm117 = vcmp.ge.s32.totalorder %v116, 0
    %vm118 = vcmp.lt.s32.totalorder %v116, 8
    %vm119 = vmand %vm117, %vm118
    %v120 = vsel %vm119, %v115, 0.0
    %v121 = vrot.slane %v89, 2
    %v122 = vadd.s32 %v92, 2
    %vm123 = vcmp.ge.s32.totalorder %v122, 0
    %vm124 = vcmp.lt.s32.totalorder %v122, 8
    %vm125 = vmand %vm123, %vm124
    %v126 = vsel %vm125, %v121, 0.0
    %v127 = vrot.slane %v89, 3
    %v128 = vadd.s32 %v92, 3
    %vm129 = vcmp.ge.s32.totalorder %v128, 0
    %vm130 = vcmp.lt.s32.totalorder %v128, 8
    %vm131 = vmand %vm129, %vm130
    %v132 = vsel %vm131, %v127, 0.0
    %v133 = vrot.slane %v90, 5
    %v134 = vsel %vm97, %v133, 0.0
    %v135 = vrot.slane %v90, 6
    %v136 = vsel %vm103, %v135, 0.0
    %v137 = vrot.slane %v90, 7
    %v138 = vsel %vm109, %v137, 0.0
    %v139 = vsel %vm113, %v90, 0.0
    %v140 = vrot.slane %v90, 1
    %v141 = vsel %vm119, %v140, 0.0
    %v142 = vrot.slane %v90, 2
    %v143 = vsel %vm125, %v142, 0.0
    %v144 = vrot.slane %v90, 3
    %v145 = vsel %vm131, %v144, 0.0
    %v146 = vpack.c.bf16 %v134, %v98
    %v147 = vpack.c.bf16 %v136, %v104
    %v148 = vpack.c.bf16 %v138, %v110
    %v149 = vpack.c.bf16 %v139, %v114
    %v150 = vpack.c.bf16 %v141, %v120
    %v151 = vpack.c.bf16 %v143, %v126
    %v152 = vpack.c.bf16 %v145, %v132
    %v153 = vld [vmem:[#allocation5] sm:$0xf]
    %v154 = vld [vmem:[#allocation5 + $0x4] sm:$0xf]
    %v155 = vld [vmem:[#allocation5 + $0x8] sm:$0xf]
    %v156 = vld [vmem:[#allocation5 + $0xc] sm:$0xf]
    %v157 = vld [vmem:[#allocation5 + $0x10] sm:$0xf]
    %v158 = vld [vmem:[#allocation5 + $0x14] sm:$0xf]
    %v159 = vld [vmem:[#allocation5 + $0x18] sm:$0xf]
    %v160 = vld [vmem:[#allocation5 + $0x1c] sm:$0xf]
    %v161 = vld [vmem:[#allocation5 + $0x20] sm:$0xf]
    %v162 = vld [vmem:[#allocation5 + $0x24] sm:$0xf]
    %v163 = vld [vmem:[#allocation5 + $0x28] sm:$0xf]
    %v164 = vld [vmem:[#allocation5 + $0x2c] sm:$0xf]
    %v165 = vld [vmem:[#allocation5 + $0x30] sm:$0xf]
    %v166 = vld [vmem:[#allocation5 + $0x34] sm:$0xf]
    %v167 = vld [vmem:[#allocation5 + $0x38] sm:$0xf]
    %v168 = vld [vmem:[#allocation5 + $0x3c] sm:$0xf]
    %v169 = vld [vmem:[#allocation5 + $0x40] sm:$0xf]
    %v170 = vld [vmem:[#allocation5 + $0x44] sm:$0xf]
    %v171 = vld [vmem:[#allocation5 + $0x48] sm:$0xf]
    %v172 = vld [vmem:[#allocation5 + $0x4c] sm:$0xf]
    %v173 = vld [vmem:[#allocation5 + $0x50] sm:$0xf]
    %v174 = vld [vmem:[#allocation5 + $0x54] sm:$0xf]
    %v175 = vld [vmem:[#allocation5 + $0x58] sm:$0xf]
    %v176 = vld [vmem:[#allocation5 + $0x5c] sm:$0xf]
    %v177 = vld [vmem:[#allocation5 + $0x60] sm:$0xf]
    %v178 = vld [vmem:[#allocation5 + $0x64] sm:$0xf]
    %v179 = vld [vmem:[#allocation5 + $0x68] sm:$0xf]
    %v180 = vld [vmem:[#allocation5 + $0x6c] sm:$0xf]
    %v181 = vld [vmem:[#allocation5 + $0x70] sm:$0xf]
    %v182 = vld [vmem:[#allocation5 + $0x74] sm:$0xf]
    %v183 = vld [vmem:[#allocation5 + $0x78] sm:$0xf]
    %v184 = vld [vmem:[#allocation5 + $0x7c] sm:$0xf]
    %v185 = vld [vmem:[#allocation5 + $0x80] sm:$0xf]
    %v186 = vld [vmem:[#allocation5 + $0x84] sm:$0xf]
    %v187 = vld [vmem:[#allocation5 + $0x88] sm:$0xf]
    %v188 = vld [vmem:[#allocation5 + $0x8c] sm:$0xf]
    %v189 = vld [vmem:[#allocation5 + $0x90] sm:$0xf]
    %v190 = vld [vmem:[#allocation5 + $0x94] sm:$0xf]
    %v191 = vld [vmem:[#allocation5 + $0x98] sm:$0xf]
    %v192 = vld [vmem:[#allocation5 + $0x9c] sm:$0xf]
    %v193 = vld [vmem:[#allocation5 + $0xa0] sm:$0xf]
    %v194 = vld [vmem:[#allocation5 + $0xa4] sm:$0xf]
    %v195 = vld [vmem:[#allocation5 + $0xa8] sm:$0xf]
    %v196 = vld [vmem:[#allocation5 + $0xac] sm:$0xf]
    %v197 = vld [vmem:[#allocation5 + $0xb0] sm:$0xf]
    %v198 = vld [vmem:[#allocation5 + $0xb4] sm:$0xf]
    %v199 = vld [vmem:[#allocation5 + $0xb8] sm:$0xf]
    %v200 = vld [vmem:[#allocation5 + $0xbc] sm:$0xf]
    %v201 = vld [vmem:[#allocation5 + $0xc0] sm:$0xf]
    %v202 = vld [vmem:[#allocation5 + $0xc4] sm:$0xf]
    %v203 = vld [vmem:[#allocation5 + $0xc8] sm:$0xf]
    %v204 = vld [vmem:[#allocation5 + $0xcc] sm:$0xf]
    %v205 = vld [vmem:[#allocation5 + $0xd0] sm:$0xf]
    %v206 = vld [vmem:[#allocation5 + $0xd4] sm:$0xf]
    %v207 = vld [vmem:[#allocation5 + $0xd8] sm:$0xf]
    %v208 = vld [vmem:[#allocation5 + $0xdc] sm:$0xf]
    %v209 = vld [vmem:[#allocation5 + $0xe0] sm:$0xf]
    %v210 = vld [vmem:[#allocation5 + $0xe4] sm:$0xf]
    %v211 = vld [vmem:[#allocation5 + $0xe8] sm:$0xf]
    %v212 = vld [vmem:[#allocation5 + $0xec] sm:$0xf]
    %v213 = vld [vmem:[#allocation5 + $0xf0] sm:$0xf]
    %v214 = vld [vmem:[#allocation5 + $0xf4] sm:$0xf]
    %v215 = vld [vmem:[#allocation5 + $0xf8] sm:$0xf]
    %v216 = vld [vmem:[#allocation5 + $0xfc] sm:$0xf]
    %v217 = vld [vmem:[#allocation5 + $0x100] sm:$0xf]
    %v218 = vld [vmem:[#allocation5 + $0x104] sm:$0xf]
    %v219 = vld [vmem:[#allocation5 + $0x108] sm:$0xf]
    %v220 = vld [vmem:[#allocation5 + $0x10c] sm:$0xf]
    %v221 = vld [vmem:[#allocation5 + $0x110] sm:$0xf]
    %v222 = vld [vmem:[#allocation5 + $0x114] sm:$0xf]
    %v223 = vld [vmem:[#allocation5 + $0x118] sm:$0xf]
    %v224 = vld [vmem:[#allocation5 + $0x11c] sm:$0xf]
    %v225 = vld [vmem:[#allocation5 + $0x120] sm:$0xf]
    %v226 = vld [vmem:[#allocation5 + $0x124] sm:$0xf]
    %v227 = vld [vmem:[#allocation5 + $0x128] sm:$0xf]
    %v228 = vld [vmem:[#allocation5 + $0x12c] sm:$0xf]
    %v229 = vld [vmem:[#allocation5 + $0x130] sm:$0xf]
    %v230 = vld [vmem:[#allocation5 + $0x134] sm:$0xf]
    %v231 = vld [vmem:[#allocation5 + $0x138] sm:$0xf]
    %v232 = vld [vmem:[#allocation5 + $0x13c] sm:$0xf]
    %v233 = vld [vmem:[#allocation5 + $0x140] sm:$0xf]
    %v234 = vld [vmem:[#allocation5 + $0x144] sm:$0xf]
    %v235 = vld [vmem:[#allocation5 + $0x148] sm:$0xf]
    %v236 = vld [vmem:[#allocation5 + $0x14c] sm:$0xf]
    %v237 = vld [vmem:[#allocation5 + $0x150] sm:$0xf]
    %v238 = vld [vmem:[#allocation5 + $0x154] sm:$0xf]
    %v239 = vld [vmem:[#allocation5 + $0x158] sm:$0xf]
    %v240 = vld [vmem:[#allocation5 + $0x15c] sm:$0xf]
    %v241 = vld [vmem:[#allocation5 + $0x160] sm:$0xf]
    %v242 = vld [vmem:[#allocation5 + $0x164] sm:$0xf]
    %v243 = vld [vmem:[#allocation5 + $0x168] sm:$0xf]
    %v244 = vld [vmem:[#allocation5 + $0x16c] sm:$0xf]
    %v245 = vld [vmem:[#allocation5 + $0x170] sm:$0xf]
    %v246 = vld [vmem:[#allocation5 + $0x174] sm:$0xf]
    %v247 = vld [vmem:[#allocation5 + $0x178] sm:$0xf]
    %v248 = vld [vmem:[#allocation5 + $0x17c] sm:$0xf]
    %v249 = vld [vmem:[#allocation5 + $0x180] sm:$0xf]
    %v250 = vld [vmem:[#allocation5 + $0x184] sm:$0xf]
    %v251 = vld [vmem:[#allocation5 + $0x188] sm:$0xf]
    %v252 = vld [vmem:[#allocation5 + $0x18c] sm:$0xf]
    %v253 = vld [vmem:[#allocation5 + $0x190] sm:$0xf]
    %v254 = vld [vmem:[#allocation5 + $0x194] sm:$0xf]
    %v255 = vld [vmem:[#allocation5 + $0x198] sm:$0xf]
    %v256 = vld [vmem:[#allocation5 + $0x19c] sm:$0xf]
    %v257 = vld [vmem:[#allocation5 + $0x1a0] sm:$0xf]
    %v258 = vld [vmem:[#allocation5 + $0x1a4] sm:$0xf]
    %v259 = vld [vmem:[#allocation5 + $0x1a8] sm:$0xf]
    %v260 = vld [vmem:[#allocation5 + $0x1ac] sm:$0xf]
    %v261 = vld [vmem:[#allocation5 + $0x1b0] sm:$0xf]
    %v262 = vld [vmem:[#allocation5 + $0x1b4] sm:$0xf]
    %v263 = vld [vmem:[#allocation5 + $0x1b8] sm:$0xf]
    %v264 = vld [vmem:[#allocation5 + $0x1bc] sm:$0xf]
    %v377 = vunpack.c.l.b16 %v153
    %v378 = vunpack.c.l.b16 %v154
    %v379 = vunpack.c.l.b16 %v155
    %v380 = vunpack.c.l.b16 %v156
    %v381 = vunpack.c.l.b16 %v157
    %v382 = vunpack.c.l.b16 %v158
    %v383 = vunpack.c.l.b16 %v159
    %v384 = vunpack.c.l.b16 %v160
    %v385 = vunpack.c.l.b16 %v161
    %v386 = vunpack.c.l.b16 %v162
    %v387 = vunpack.c.l.b16 %v163
    %v388 = vunpack.c.l.b16 %v164
    %v389 = vunpack.c.l.b16 %v165
    %v390 = vunpack.c.l.b16 %v166
    %v391 = vunpack.c.l.b16 %v167
    %v392 = vunpack.c.l.b16 %v168
    %v393 = vunpack.c.l.b16 %v169
    %v394 = vunpack.c.l.b16 %v170
    %v395 = vunpack.c.l.b16 %v171
    %v396 = vunpack.c.l.b16 %v172
    %v397 = vunpack.c.l.b16 %v173
    %v398 = vunpack.c.l.b16 %v174
    %v399 = vunpack.c.l.b16 %v175
    %v400 = vunpack.c.l.b16 %v176
    %v401 = vunpack.c.l.b16 %v177
    %v402 = vunpack.c.l.b16 %v178
    %v403 = vunpack.c.l.b16 %v179
    %v404 = vunpack.c.l.b16 %v180
    %v405 = vunpack.c.l.b16 %v181
    %v406 = vunpack.c.l.b16 %v182
    %v407 = vunpack.c.l.b16 %v183
    %v408 = vunpack.c.l.b16 %v184
    %v409 = vunpack.c.l.b16 %v185
    %v410 = vunpack.c.l.b16 %v186
    %v411 = vunpack.c.l.b16 %v187
    %v412 = vunpack.c.l.b16 %v188
    %v413 = vunpack.c.l.b16 %v189
    %v414 = vunpack.c.l.b16 %v190
    %v415 = vunpack.c.l.b16 %v191
    %v416 = vunpack.c.l.b16 %v192
    %v417 = vunpack.c.l.b16 %v193
    %v418 = vunpack.c.l.b16 %v194
    %v419 = vunpack.c.l.b16 %v195
    %v420 = vunpack.c.l.b16 %v196
    %v421 = vunpack.c.l.b16 %v197
    %v422 = vunpack.c.l.b16 %v198
    %v423 = vunpack.c.l.b16 %v199
    %v424 = vunpack.c.l.b16 %v200
    %v425 = vunpack.c.l.b16 %v201
    %v426 = vunpack.c.l.b16 %v202
    %v427 = vunpack.c.l.b16 %v203
    %v428 = vunpack.c.l.b16 %v204
    %v429 = vunpack.c.l.b16 %v205
    %v430 = vunpack.c.l.b16 %v206
    %v431 = vunpack.c.l.b16 %v207
    %v432 = vunpack.c.l.b16 %v208
    %v433 = vunpack.c.l.b16 %v209
    %v434 = vunpack.c.l.b16 %v210
    %v435 = vunpack.c.l.b16 %v211
    %v436 = vunpack.c.l.b16 %v212
    %v437 = vunpack.c.l.b16 %v213
    %v438 = vunpack.c.l.b16 %v214
    %v439 = vunpack.c.l.b16 %v215
    %v440 = vunpack.c.l.b16 %v216
    %v441 = vunpack.c.l.b16 %v217
    %v442 = vunpack.c.l.b16 %v218
    %v443 = vunpack.c.l.b16 %v219
    %v444 = vunpack.c.l.b16 %v220
    %v445 = vunpack.c.l.b16 %v221
    %v446 = vunpack.c.l.b16 %v222
    %v447 = vunpack.c.l.b16 %v223
    %v448 = vunpack.c.l.b16 %v224
    %v449 = vunpack.c.l.b16 %v225
    %v450 = vunpack.c.l.b16 %v226
    %v451 = vunpack.c.l.b16 %v227
    %v452 = vunpack.c.l.b16 %v228
    %v453 = vunpack.c.l.b16 %v229
    %v454 = vunpack.c.l.b16 %v230
    %v455 = vunpack.c.l.b16 %v231
    %v456 = vunpack.c.l.b16 %v232
    %v457 = vunpack.c.l.b16 %v233
    %v458 = vunpack.c.l.b16 %v234
    %v459 = vunpack.c.l.b16 %v235
    %v460 = vunpack.c.l.b16 %v236
    %v461 = vunpack.c.l.b16 %v237
    %v462 = vunpack.c.l.b16 %v238
    %v463 = vunpack.c.l.b16 %v239
    %v464 = vunpack.c.l.b16 %v240
    %v465 = vunpack.c.l.b16 %v241
    %v466 = vunpack.c.l.b16 %v242
    %v467 = vunpack.c.l.b16 %v243
    %v468 = vunpack.c.l.b16 %v244
    %v469 = vunpack.c.l.b16 %v245
    %v470 = vunpack.c.l.b16 %v246
    %v471 = vunpack.c.l.b16 %v247
    %v472 = vunpack.c.l.b16 %v248
    %v473 = vunpack.c.l.b16 %v249
    %v474 = vunpack.c.l.b16 %v250
    %v475 = vunpack.c.l.b16 %v251
    %v476 = vunpack.c.l.b16 %v252
    %v477 = vunpack.c.l.b16 %v253
    %v478 = vunpack.c.l.b16 %v254
    %v479 = vunpack.c.l.b16 %v255
    %v480 = vunpack.c.l.b16 %v256
    %v481 = vunpack.c.l.b16 %v257
    %v482 = vunpack.c.l.b16 %v258
    %v483 = vunpack.c.l.b16 %v259
    %v484 = vunpack.c.l.b16 %v260
    %v485 = vunpack.c.l.b16 %v261
    %v486 = vunpack.c.l.b16 %v262
    %v487 = vunpack.c.l.b16 %v263
    %v488 = vunpack.c.l.b16 %v264
    %v489 = vpack.c.b16 %v378, %v377
    %v490 = vpack.c.b16 %v380, %v379
    %v491 = vpack.c.b16 %v382, %v381
    %v492 = vpack.c.b16 %v384, %v383
    %v493 = vpack.c.b16 %v386, %v385
    %v494 = vpack.c.b16 %v388, %v387
    %v495 = vpack.c.b16 %v390, %v389
    %v496 = vpack.c.b16 %v392, %v391
    %v497 = vpack.c.b16 %v394, %v393
    %v498 = vpack.c.b16 %v396, %v395
    %v499 = vpack.c.b16 %v398, %v397
    %v500 = vpack.c.b16 %v400, %v399
    %v501 = vpack.c.b16 %v402, %v401
    %v502 = vpack.c.b16 %v404, %v403
    %v503 = vpack.c.b16 %v406, %v405
    %v504 = vpack.c.b16 %v408, %v407
    %v505 = vpack.c.b16 %v410, %v409
    %v506 = vpack.c.b16 %v412, %v411
    %v507 = vpack.c.b16 %v414, %v413
    %v508 = vpack.c.b16 %v416, %v415
    %v509 = vpack.c.b16 %v418, %v417
    %v510 = vpack.c.b16 %v420, %v419
    %v511 = vpack.c.b16 %v422, %v421
    %v512 = vpack.c.b16 %v424, %v423
    %v513 = vpack.c.b16 %v426, %v425
    %v514 = vpack.c.b16 %v428, %v427
    %v515 = vpack.c.b16 %v430, %v429
    %v516 = vpack.c.b16 %v432, %v431
    %v517 = vpack.c.b16 %v434, %v433
    %v518 = vpack.c.b16 %v436, %v435
    %v519 = vpack.c.b16 %v438, %v437
    %v520 = vpack.c.b16 %v440, %v439
    %v521 = vpack.c.b16 %v442, %v441
    %v522 = vpack.c.b16 %v444, %v443
    %v523 = vpack.c.b16 %v446, %v445
    %v524 = vpack.c.b16 %v448, %v447
    %v525 = vpack.c.b16 %v450, %v449
    %v526 = vpack.c.b16 %v452, %v451
    %v527 = vpack.c.b16 %v454, %v453
    %v528 = vpack.c.b16 %v456, %v455
    %v529 = vpack.c.b16 %v458, %v457
    %v530 = vpack.c.b16 %v460, %v459
    %v531 = vpack.c.b16 %v462, %v461
    %v532 = vpack.c.b16 %v464, %v463
    %v533 = vpack.c.b16 %v466, %v465
    %v534 = vpack.c.b16 %v468, %v467
    %v535 = vpack.c.b16 %v470, %v469
    %v536 = vpack.c.b16 %v472, %v471
    %v537 = vpack.c.b16 %v474, %v473
    %v538 = vpack.c.b16 %v476, %v475
    %v539 = vpack.c.b16 %v478, %v477
    %v540 = vpack.c.b16 %v480, %v479
    %v541 = vpack.c.b16 %v482, %v481
    %v542 = vpack.c.b16 %v484, %v483
    %v543 = vpack.c.b16 %v486, %v485
    %v544 = vpack.c.b16 %v488, %v487
    %601 = vmatprep.subr.bf16.mxu0 0
    %602 = vmatpush1.bf16.msra.mxu0 %v489
    %603 = vmatprep.subr.bf16.mxu0 0
    %604 = vmatpush1.bf16.msra.mxu0 %v490
    %605 = vmatprep.subr.bf16.mxu0 0
    %606 = vmatpush1.bf16.msra.mxu0 %v491
    %607 = vmatprep.subr.bf16.mxu0 0
    %608 = vmatpush1.bf16.msra.mxu0 %v492
    %609 = vmatprep.subr.bf16.mxu0 0
    %610 = vmatpush1.bf16.msra.mxu0 %v493
    %611 = vmatprep.subr.bf16.mxu0 0
    %612 = vmatpush1.bf16.msra.mxu0 %v494
    %613 = vmatprep.subr.bf16.mxu0 0
    %614 = vmatpush1.bf16.msra.mxu0 %v495
    %615 = vmatprep.subr.bf16.mxu0 0
    %616 = vmatpush1.bf16.msra.mxu0 %v496
    %617 = vmatprep.subr.bf16.mxu0 0
    %618 = vmatpush1.bf16.msra.mxu0 %v497
    %619 = vmatprep.subr.bf16.mxu0 0
    %620 = vmatpush1.bf16.msra.mxu0 %v498
    %621 = vmatprep.subr.bf16.mxu0 0
    %622 = vmatpush1.bf16.msra.mxu0 %v499
    %623 = vmatprep.subr.bf16.mxu0 0
    %624 = vmatpush1.bf16.msra.mxu0 %v500
    %625 = vmatprep.subr.bf16.mxu0 0
    %626 = vmatpush1.bf16.msra.mxu0 %v501
    %627 = vmatprep.subr.bf16.mxu0 0
    %628 = vmatpush1.bf16.msra.mxu0 %v502
    %629 = vmatprep.subr.bf16.mxu0 0
    %630 = vmatpush1.bf16.msra.mxu0 %v503
    %631 = vmatprep.subr.bf16.mxu0 0
    %632 = vmatpush1.bf16.msra.mxu0 %v504
    %633 = vmatprep.mubr.bf16.mxu0 %v147
    %634 = vmatmul.mubr.bf16.gmra.mrb[0].mxu0 %v146
    %v635 = vpop.f32.mrb[0].mxu0
    %v636 = vadd.f32 0.0, %v635
    %v637 = vpop.f32.mrb[0].mxu0
    %v638 = vpop.f32.mrb[0].mxu0
    %v639 = vadd.f32 0.0, %v638
    %v640 = vpop.f32.mrb[0].mxu0
    %641 = vdwg.mxu0
    %642 = vmatprep.subr.bf16.mxu0 0
    %643 = vmatpush1.bf16.msra.mxu0 %v505
    %644 = vmatprep.subr.bf16.mxu0 0
    %645 = vmatpush1.bf16.msra.mxu0 %v506
    %646 = vmatprep.subr.bf16.mxu0 0
    %647 = vmatpush1.bf16.msra.mxu0 %v507
    %648 = vmatprep.subr.bf16.mxu0 0
    %649 = vmatpush1.bf16.msra.mxu0 %v508
    %650 = vmatprep.subr.bf16.mxu0 0
    %651 = vmatpush1.bf16.msra.mxu0 %v509
    %652 = vmatprep.subr.bf16.mxu0 0
    %653 = vmatpush1.bf16.msra.mxu0 %v510
    %654 = vmatprep.subr.bf16.mxu0 0
    %655 = vmatpush1.bf16.msra.mxu0 %v511
    %656 = vmatprep.subr.bf16.mxu0 0
    %657 = vmatpush1.bf16.msra.mxu0 %v512
    %658 = vmatprep.subr.bf16.mxu0 0
    %659 = vmatpush1.bf16.msra.mxu0 %v513
    %660 = vmatprep.subr.bf16.mxu0 0
    %661 = vmatpush1.bf16.msra.mxu0 %v514
    %662 = vmatprep.subr.bf16.mxu0 0
    %663 = vmatpush1.bf16.msra.mxu0 %v515
    %664 = vmatprep.subr.bf16.mxu0 0
    %665 = vmatpush1.bf16.msra.mxu0 %v516
    %666 = vmatprep.subr.bf16.mxu0 0
    %667 = vmatpush1.bf16.msra.mxu0 %v517
    %668 = vmatprep.subr.bf16.mxu0 0
    %669 = vmatpush1.bf16.msra.mxu0 %v518
    %670 = vmatprep.subr.bf16.mxu0 0
    %671 = vmatpush1.bf16.msra.mxu0 %v519
    %672 = vmatprep.subr.bf16.mxu0 0
    %673 = vmatpush1.bf16.msra.mxu0 %v520
    %674 = vmatprep.mubr.bf16.mxu0 %v149
    %675 = vmatmul.mubr.bf16.gmra.mrb[0].mxu0 %v148
    %v676 = vpop.f32.mrb[0].mxu0
    %v677 = vadd.f32 %v636, %v676
    %v678 = vpop.f32.mrb[0].mxu0
    %v679 = vpop.f32.mrb[0].mxu0
    %v680 = vadd.f32 %v639, %v679
    %v681 = vpop.f32.mrb[0].mxu0
    %682 = vdwg.mxu0
    %683 = vmatprep.subr.bf16.mxu0 0
    %684 = vmatpush1.bf16.msra.mxu0 %v521
    %685 = vmatprep.subr.bf16.mxu0 0
    %686 = vmatpush1.bf16.msra.mxu0 %v522
    %687 = vmatprep.subr.bf16.mxu0 0
    %688 = vmatpush1.bf16.msra.mxu0 %v523
    %689 = vmatprep.subr.bf16.mxu0 0
    %690 = vmatpush1.bf16.msra.mxu0 %v524
    %691 = vmatprep.subr.bf16.mxu0 0
    %692 = vmatpush1.bf16.msra.mxu0 %v525
    %693 = vmatprep.subr.bf16.mxu0 0
    %694 = vmatpush1.bf16.msra.mxu0 %v526
    %695 = vmatprep.subr.bf16.mxu0 0
    %696 = vmatpush1.bf16.msra.mxu0 %v527
    %697 = vmatprep.subr.bf16.mxu0 0
    %698 = vmatpush1.bf16.msra.mxu0 %v528
    %699 = vmatprep.subr.bf16.mxu0 0
    %700 = vmatpush1.bf16.msra.mxu0 %v529
    %701 = vmatprep.subr.bf16.mxu0 0
    %702 = vmatpush1.bf16.msra.mxu0 %v530
    %703 = vmatprep.subr.bf16.mxu0 0
    %704 = vmatpush1.bf16.msra.mxu0 %v531
    %705 = vmatprep.subr.bf16.mxu0 0
    %706 = vmatpush1.bf16.msra.mxu0 %v532
    %707 = vmatprep.subr.bf16.mxu0 0
    %708 = vmatpush1.bf16.msra.mxu0 %v533
    %709 = vmatprep.subr.bf16.mxu0 0
    %710 = vmatpush1.bf16.msra.mxu0 %v534
    %711 = vmatprep.subr.bf16.mxu0 0
    %712 = vmatpush1.bf16.msra.mxu0 %v535
    %713 = vmatprep.subr.bf16.mxu0 0
    %714 = vmatpush1.bf16.msra.mxu0 %v536
    %715 = vmatprep.mubr.bf16.mxu0 %v151
    %716 = vmatmul.mubr.bf16.gmra.mrb[0].mxu0 %v150
    %v717 = vpop.f32.mrb[0].mxu0
    %v718 = vadd.f32 %v677, %v717
    %v719 = vpop.f32.mrb[0].mxu0
    %v720 = vpop.f32.mrb[0].mxu0
    %v721 = vadd.f32 %v680, %v720
    %v722 = vpop.f32.mrb[0].mxu0
    %723 = vdwg.mxu0
    %724 = vmatprep.subr.bf16.mxu0 0
    %725 = vmatpush1.bf16.msra.mxu0 %v537
    %726 = vmatprep.subr.bf16.mxu0 0
    %727 = vmatpush1.bf16.msra.mxu0 %v538
    %728 = vmatprep.subr.bf16.mxu0 0
    %729 = vmatpush1.bf16.msra.mxu0 %v539
    %730 = vmatprep.subr.bf16.mxu0 0
    %731 = vmatpush1.bf16.msra.mxu0 %v540
    %732 = vmatprep.subr.bf16.mxu0 0
    %733 = vmatpush1.bf16.msra.mxu0 %v541
    %734 = vmatprep.subr.bf16.mxu0 0
    %735 = vmatpush1.bf16.msra.mxu0 %v542
    %736 = vmatprep.subr.bf16.mxu0 0
    %737 = vmatpush1.bf16.msra.mxu0 %v543
    %738 = vmatprep.subr.bf16.mxu0 0
    %739 = vmatpush1.bf16.msra.mxu0 %v544
    %740 = vmatprep.subr.bf16.mxu0 0
    %741 = vmatpush1.bf16.msra.mxu0 0
    %742 = vmatprep.subr.bf16.mxu0 0
    %743 = vmatpush1.bf16.msra.mxu0 0
    %744 = vmatprep.subr.bf16.mxu0 0
    %745 = vmatpush1.bf16.msra.mxu0 0
    %746 = vmatprep.subr.bf16.mxu0 0
    %747 = vmatpush1.bf16.msra.mxu0 0
    %748 = vmatprep.subr.bf16.mxu0 0
    %749 = vmatpush1.bf16.msra.mxu0 0
    %750 = vmatprep.subr.bf16.mxu0 0
    %751 = vmatpush1.bf16.msra.mxu0 0
    %752 = vmatprep.subr.bf16.mxu0 0
    %753 = vmatpush1.bf16.msra.mxu0 0
    %754 = vmatprep.subr.bf16.mxu0 0
    %755 = vmatpush1.bf16.msra.mxu0 0
    %756 = vmatprep.mubr.bf16.mxu0 0
    %757 = vmatmul.mubr.bf16.gmra.mrb[0].mxu0 %v152
    %v758 = vpop.f32.mrb[0].mxu0
    %v759 = vadd.f32 %v718, %v758
    %v760 = vpop.f32.mrb[0].mxu0
    %v761 = vpop.f32.mrb[0].mxu0
    %v762 = vadd.f32 %v721, %v761
    %v763 = vpop.f32.mrb[0].mxu0
    %764 = vdwg.mxu0
    %v765 = vxor.u32 %v759, 2147483648
    %v766 = vxor.u32 %v762, 2147483648
    %v767 = vmul.f32 %v765, 1.442695
    %v768 = vpow.pop %v767
    %v769 = vmul.f32 %v766, 1.442695
    %v770 = vpow.pop %v769
    %v771 = vadd.f32 %v768, 1.0
    %v772 = vadd.f32 %v770, 1.0
    %v773 = vrcp.pop %v771
    %v774 = vmul.f32 1.0, %v773
    %v775 = vrcp.pop %v772
    %v776 = vmul.f32 1.0, %v775
    %777 = vst [vmem:[#allocation7] sm:$0xff] %v774
    %778 = vst [vmem:[#allocation7 + $0x8] sm:$0xff] %v776
    // Predicated region
    $region18: #{tpu_custom_call.1} parent=1 // pred_check
      _
    $region19: #{tpu_custom_call.1} parent=1 // pred_check_branch
      %780 = sbr.rel (0) target = $region21
    $region20: #{tpu_custom_call.1} parent=1 // pred_region
      %s782 = ssub.s32 256, 256
      %783 = vsyncadd [#allocation4], %s782
      %s784 = sshll.u32 [#allocation7], 4
      %s785 = int_to_ptr.vmem [resolvable:$true] %s784
      %790 = dma.vmem_to_hbm [thread:$0]  %s785, 256, %s2, [#allocation4], 128, 128, 8
    $region21: #{tpu_custom_call.1} parent=1 // pred_fallthru
      _
    // Predicated region
    $region22: #{tpu_custom_call.1} parent=1 // pred_check
      _
    $region23: #{tpu_custom_call.1} parent=1 // pred_check_branch
      %792 = sbr.rel (0) target = $region25
    $region24: #{tpu_custom_call.1} parent=1 // pred_region
      %793 = dma.done [#allocation4], 256
    $region25: #{tpu_custom_call.1} parent=1 // pred_fallthru
      _
    %794 = vsyncpa [#allocation3], 1
    %795 = vsyncpa [#allocation6], 1
    %796 = vsyncpa [#allocation4], 1

</llo_original>
